<compile_context>
chip_gen: v5e
topology: v5e:2x2
jax: 0.10.0
libtpu: 0.0.40
codegen_flags: <defaults>
</compile_context>

<pallas_src>
import math
import functools

import numpy as np
import jax
import jax.numpy as jnp
from jax import lax
from jax.experimental import pallas as pl
from jax.experimental.pallas import tpu as pltpu


# Static enumerations shared by the host-side wiring/mask builders and kernel.
_SHIFTS = tuple((dr, dc) for dr in range(-2, 4) for dc in range(-2, 4))   # 36
_ECOMBOS = tuple((ey, ex) for ey in range(-1, 3) for ex in range(-1, 3))  # 16


def _round_up(v, m):
    return ((v + m - 1) // m) * m


def _roll_probe_kernel(x_ref, o_ref):
    o_ref[...] = pltpu.roll(x_ref[...], 1, axis=1)


@functools.lru_cache(maxsize=None)
def _roll_is_np_convention():
    """One-time probe: True iff pltpu.roll(x, s)[..., p] == x[..., p - s]
    (np.roll convention).  Pins the rotate direction so the static shifts in
    the main kernel are always correct."""
    x = lax.broadcasted_iota(jnp.float32, (8, 128), 1)
    out = pl.pallas_call(
        _roll_probe_kernel,
        out_shape=jax.ShapeDtypeStruct((8, 128), jnp.float32),
    )(x)
    return bool(out[0, 0] == 127.0)


def _dwconv2d_bn_kernel(x_ref, wdw_ref, wyx_ref, wall_ref, wpw_ref, mask_ref,
                        out_ref, *, W, KBp, np_roll):
    x = x_ref[...]                                   # (Cp, HWp) f32
    Cp, HWp = x.shape

    def shift_src(v, dr, dc):
        # y[:, q] = v[:, (q + dr*W + dc) % HWp]; wrapped / out-of-image /
        # lane-padded sources are zeroed by the host-precomputed masks.
        s = (dr * W + dc) % HWp
        if s == 0:
            return v
        amt = (-s) % HWp if np_roll else s
        return pltpu.roll(v, amt, axis=1)

    def mask_row(dr, dc):
        s_idx = _SHIFTS.index((dr, dc))
        return mask_ref[s_idx:s_idx + 1, :]          # (1, HWp) constant load

    # ---- offset_generator[0]: depthwise 3x3, pad=1, no bias (roll + FMA) ----
    wdw = wdw_ref[...]                               # (Cp, 9)
    dwout = jnp.zeros(x.shape, jnp.float32)
    for k in range(9):
        i, j = divmod(k, 3)
        dr, dc = i - 1, j - 1
        dwout = dwout + shift_src(x, dr, dc) * (wdw[:, k:k + 1] * mask_row(dr, dc))

    # ---- offset_generator[1]: one fused 1x1 conv -> (dy, dx), clamp [-1,1] ---
    dyx = jnp.clip(jnp.dot(wyx_ref[...], dwout,
                           preferred_element_type=jnp.float32), -1.0, 1.0)
    dy = dyx[:KBp, :]                                # (KBp, HWp), rows >=9 pad
    dx = dyx[KBp:, :]

    # ---- deformable depthwise 3x3: hat-function bilinear corner factors -----
    ry = {e: jnp.maximum(1.0 - jnp.abs(dy - e), 0.0) for e in range(-1, 3)}
    cx = {e: jnp.maximum(1.0 - jnp.abs(dx - e), 0.0) for e in range(-1, 3)}
    gbig = jnp.concatenate([ry[ey] * cx[ex] for ey, ex in _ECOMBOS], axis=0)
    # Per-(shift, channel) multiplier planes in one MXU contraction.
    planes = jnp.dot(wall_ref[...], gbig, preferred_element_type=jnp.float32)

    acc = jnp.zeros(x.shape, jnp.float32)
    for s_idx, (dr, dc) in enumerate(_SHIFTS):
        w = planes[s_idx * Cp:(s_idx + 1) * Cp, :] * mask_ref[s_idx:s_idx + 1, :]
        acc = acc + shift_src(x, dr, dc) * w

    # ---- pwconv (1x1, no bias) + Hardswish ----------------------------------
    y = jnp.dot(wpw_ref[...], acc, preferred_element_type=jnp.float32)
    out_ref[...] = y * jnp.clip(y + 3.0, 0.0, 6.0) * (1.0 / 6.0)


def dwconv2d_bn(x_nchw, w_dw, w_off, w_dcn, w_pw):
    """x: (B, C, H, W) f32 -> (B, out_ch, H, W) f32."""
    B, C, H, W = x_nchw.shape
    O = w_pw.shape[0]
    HW = H * W
    f32 = jnp.float32

    # Alignment guards: channels/output to 8 sublanes, flattened HW to 128 lanes.
    Cp = _round_up(C, 8)
    Op = _round_up(O, 8)
    HWp = _round_up(max(HW, 128), 128)
    KBp = _round_up(9, 8)                            # per-tap offset rows -> 16
    S = len(_SHIFTS)                                 # 36
    Sp = _round_up(S, 8)                             # 40

    x_flat = jnp.pad(x_nchw.astype(f32).reshape(B, C, HW),
                     ((0, 0), (0, Cp - C), (0, HWp - HW))).reshape(B * Cp, HWp)

    wdw_p = jnp.pad(w_dw.astype(f32), ((0, Cp - C), (0, 0)))           # (Cp, 9)
    wyx = jnp.zeros((2 * KBp, Cp), f32)                                # fused dy/dx
    wyx = wyx.at[0:9, 0:C].set(w_off[0::2].astype(f32))
    wyx = wyx.at[KBp:KBp + 9, 0:C].set(w_off[1::2].astype(f32))
    wpw_p = jnp.pad(w_pw.astype(f32), ((0, Op - O), (0, Cp - C)))      # (Op, Cp)

    # Static wiring: route the dcn depthwise weight of every (tap, e-combo)
    # pair to the (shift, channel) row it contributes to.
    rows, cols, ksel, csel = [], [], [], []
    for e_idx, (ey, ex) in enumerate(_ECOMBOS):
        for k in range(9):
            i, j = divmod(k, 3)
            s_idx = _SHIFTS.index((i - 1 + ey, j - 1 + ex))
            for c in range(C):
                rows.append(s_idx * Cp + c)
                cols.append(e_idx * KBp + k)
                ksel.append(k)
                csel.append(c)
    # Scatter targets must be unique or .at[].set silently drops contributions.
    assert len(set(zip(rows, cols))) == len(rows)
    wall = jnp.zeros((S * Cp, 16 * KBp), f32).at[
        jnp.asarray(rows), jnp.asarray(cols)].set(
            w_dcn.astype(f32)[jnp.asarray(csel), jnp.asarray(ksel)])

    # Host-precomputed boundary masks: one combined (row ok & col ok) plane per
    # static shift; lane-pad region (HW..HWp) is zero so padded lanes stay 0.
    pr = np.arange(HW) // W
    pc = np.arange(HW) % W
    mrows = np.zeros((Sp, HWp), np.float32)
    for s_idx, (dr, dc) in enumerate(_SHIFTS):
        ok = (pr + dr >= 0) & (pr + dr < H) & (pc + dc >= 0) & (pc + dc < W)
        mrows[s_idx, :HW] = ok.astype(np.float32)
    masks = jnp.asarray(mrows)

    kernel = functools.partial(_dwconv2d_bn_kernel, W=W, KBp=KBp,
                               np_roll=_roll_is_np_convention())
    out = pl.pallas_call(
        kernel,
        out_shape=jax.ShapeDtypeStruct((B * Op, HWp), jnp.float32),
        grid=(B,),                                   # one batch element / step
        in_specs=[
            pl.BlockSpec((Cp, HWp), lambda g: (g, 0)),
            pl.BlockSpec((Cp, 9), lambda g: (0, 0)),
            pl.BlockSpec((2 * KBp, Cp), lambda g: (0, 0)),
            pl.BlockSpec((S * Cp, 16 * KBp), lambda g: (0, 0)),
            pl.BlockSpec((Op, Cp), lambda g: (0, 0)),
            pl.BlockSpec((Sp, HWp), lambda g: (0, 0)),
        ],
        out_specs=pl.BlockSpec((Op, HWp), lambda g: (g, 0)),
        compiler_params=pltpu.CompilerParams(
            dimension_semantics=("parallel",),
            # Per-step working set is ~1.5 MiB at these sizes; 32 MiB keeps
            # ample headroom even under v7x's 64 MiB per-core VMEM.
            vmem_limit_bytes=32 << 20,
        ),
    )(x_flat, wdw_p, wyx, wall, wpw_p, masks)
    return out.reshape(B, Op, HWp)[:, :O, :HW].reshape(B, O, H, W)


def _reference(x, w_dw, w_off, w_dcn, w_pw):
    """Plain-JAX reference with identical semantics (sanity check)."""
    B, C, H, W = x.shape
    xp = jnp.pad(x, ((0, 0), (0, 0), (1, 1), (1, 1)))
    dw = jnp.zeros((B, C, H, W), jnp.float32)
    for k in range(9):
        i, j = divmod(k, 3)
        dw = dw + xp[:, :, i:i + H, j:j + W] * w_dw[:, k][None, :, None, None]
    off = jnp.clip(jnp.einsum('oc,bchw->bohw', w_off, dw), -1.0, 1.0)
    hh = jnp.arange(H, dtype=jnp.float32)[:, None]
    ww = jnp.arange(W, dtype=jnp.float32)[None, :]
    x_flat = x.reshape(B, C, H * W)
    acc = jnp.zeros((B, C, H, W), jnp.float32)
    for k in range(9):
        i, j = divmod(k, 3)
        py = hh + (i - 1) + off[:, 2 * k]
        px = ww + (j - 1) + off[:, 2 * k + 1]
        y0 = jnp.floor(py)
        x0 = jnp.floor(px)
        ly, lx = py - y0, px - x0
        val = jnp.zeros((B, C, H, W), jnp.float32)
        for dyc in (0, 1):
            for dxc in (0, 1):
                yc, xc = y0 + dyc, x0 + dxc
                wgt = (ly if dyc else 1.0 - ly) * (lx if dxc else 1.0 - lx)
                valid = (yc >= 0) & (yc < H) & (xc >= 0) & (xc < W)
                yci = jnp.clip(yc, 0, H - 1).astype(jnp.int32)
                xci = jnp.clip(xc, 0, W - 1).astype(jnp.int32)
                flat = (yci * W + xci).reshape(B, 1, H * W)
                g = jnp.take_along_axis(x_flat, flat, axis=2).reshape(B, C, H, W)
                val = val + jnp.where(valid, wgt, 0.0)[:, None] * g
        acc = acc + val * w_dcn[:, k][None, :, None, None]
    y = jnp.einsum('oc,bchw->bohw', w_pw, acc)
    return y * jnp.clip(y + 3.0, 0.0, 6.0) / 6.0


if __name__ == "__main__":
    B, C, O, Hs, Ws = 2, 4, 8, 16, 16
    key = jax.random.PRNGKey(0)
    k1, k2, k3, k4, kx = jax.random.split(key, 5)

    # nn.Conv2d init from the module: normal(0, sqrt(2/n)), n = kh*kw*out_ch
    w_dw = jax.random.normal(k1, (C, 9), jnp.float32) * math.sqrt(2.0 / (3 * 3 * C))
    w_off = jax.random.normal(k2, (18, C), jnp.float32) * math.sqrt(2.0 / (1 * 1 * 18))
    # DeformConv2d weight is not an nn.Conv2d; any deterministic init is fine.
    w_dcn = jax.random.normal(k3, (C, 9), jnp.float32) * math.sqrt(1.0 / 9.0)
    w_pw = jax.random.normal(k4, (O, C), jnp.float32) * math.sqrt(2.0 / (1 * 1 * O))

    x = jax.random.normal(kx, (B, C, Hs, Ws), jnp.float32)

    out = jax.block_until_ready(dwconv2d_bn(x, w_dw, w_off, w_dcn, w_pw))
    ref = jax.block_until_ready(_reference(x, w_dw, w_off, w_dcn, w_pw))

    assert out.shape == (B, O, Hs, Ws)
    assert bool(jnp.all(jnp.isfinite(out)))
    err = float(jnp.max(jnp.abs(out - ref)))
    assert err < 1e-3, f"max abs error vs reference: {err}"
    print("KERNEL_OK")
</pallas_src>

<mosaic_0001>
module attributes {stable_mosaic.version = 11 : i64} {
  func.func @_roll_probe_kernel(%arg0: memref<8x128xf32, #tpu.memory_space<vmem>>, %arg1: memref<8x128xf32, #tpu.memory_space<vmem>>) attributes {dimension_semantics = [], scalar_prefetch = 0 : i64, scratch_operands = 0 : i64, tpu.core_type = #tpu.core_type<tc>} {
    %c0 = arith.constant 0 : index
    %c0_0 = arith.constant 0 : index
    %0 = vector.load %arg0[%c0, %c0_0] : memref<8x128xf32, #tpu.memory_space<vmem>>, vector<8x128xf32>
    %c1_i32 = arith.constant 1 : i32
    %1 = tpu.dynamic_rotate %0 by %c1_i32 dim 1 : vector<8x128xf32>, i32 -> vector<8x128xf32>
    %c0_1 = arith.constant 0 : index
    %c0_2 = arith.constant 0 : index
    %2 = vector.load %arg1[%c0_1, %c0_2] : memref<8x128xf32, #tpu.memory_space<vmem>>, vector<8x128xf32>
    tpu.vector_store %arg1[%c0_1, %c0_2], %1 {strides = array<i32>} : memref<8x128xf32, #tpu.memory_space<vmem>>, vector<8x128xf32>,
    return
  }
}

</mosaic_0001>

<llo_original>
// kernel: tpu_custom_call.1
$region0: #{tpu_custom_call.1}
  #allocation0 [shape = 'u32[]', space=smem, size = 0x4, offset = 0x4, fixed_abs, tag = 'smem constant byte address 0x4 - core index']
  #allocation1 [shape = 'u32[72,128]{1,0:T(1,128)}', space=vmem, size = 0x9000, scoped, tag = 'internal scratch']
  %s0 = inlined_call_operand.hbm [shape: f32[8,128], index: 0, kind: input, shape index: {}]
  %s1 = inlined_call_operand.hbm [shape: f32[8,128], index: 1, kind: output, shape index: {}]
  %s2 = sld [smem:[#allocation0]]
  $region18: #{tpu_custom_call.1} parent=0
    _
  %s4 = ssub.s32 1, %s2
  %s5 = scalar_select 0, %s4, %s2
  $region1: #{tpu_custom_call.1} parent=0
    #allocation2 [shape = 'u8[4096]{0}', space=vmem, size = 0x1000, scoped, tag = 'input window, operand 0, single buffered']
    #allocation3 [shape = 's32[1]{0}', space=sflag, size = 0x4, scoped, tag = 'scoped memory for tpu_custom_call.1']
    #allocation4 [shape = 's32[1]{0}', space=sflag, size = 0x4, scoped, tag = 'scoped memory for tpu_custom_call.1']
    #allocation5 [shape = 'u8[4096]{0}', space=vmem, size = 0x1000, scoped, tag = 'output window, operand 0, single buffered']
    %6 = vsyncpa [#allocation3], 0
    %7 = vsyncpa [#allocation4], 0
    // Predicated region
    $region2: #{tpu_custom_call.1} parent=1 // pred_check
      _
    $region3: #{tpu_custom_call.1} parent=1 // pred_check_branch
      %9 = sbr.rel (0) target = $region5
    $region4: #{tpu_custom_call.1} parent=1 // pred_region
      %11 = vsyncadd [#allocation3], 0
      %s13 = sshll.u32 %s0, 4
      %s14 = int_to_ptr.hbm [resolvable:$true] %s13
      %s15 = sshll.u32 [#allocation2], 4
      %s16 = int_to_ptr.vmem [resolvable:$true] %s15
      %18 = dma.hbm_to_vmem [thread:$0]  %s14, 128, %s16, [#allocation3]
    $region5: #{tpu_custom_call.1} parent=1 // pred_fallthru
      _
    // Predicated region
    $region6: #{tpu_custom_call.1} parent=1 // pred_check
      _
    $region7: #{tpu_custom_call.1} parent=1 // pred_check_branch
      %20 = sbr.rel (0) target = $region9
    $region8: #{tpu_custom_call.1} parent=1 // pred_region
      %22 = dma.done [#allocation3], 128
    $region9: #{tpu_custom_call.1} parent=1 // pred_fallthru
      _
    %v23 = vld [vmem:[#allocation2] sm:$0xff]
    %24 = vrot.lane.b32.xlu0 %v23, 1
    %v25 = vpop.permute.xlu0 %24
    %26 = vst [vmem:[#allocation5] sm:$0xff] %v25
    // Predicated region
    $region10: #{tpu_custom_call.1} parent=1 // pred_check
      _
    $region11: #{tpu_custom_call.1} parent=1 // pred_check_branch
      %28 = sbr.rel (0) target = $region13
    $region12: #{tpu_custom_call.1} parent=1 // pred_region
      %30 = vsyncadd [#allocation4], 0
      %s32 = sshll.u32 [#allocation5], 4
      %s33 = int_to_ptr.vmem [resolvable:$true] %s32
      %s34 = sshll.u32 %s1, 4
      %s35 = int_to_ptr.hbm [resolvable:$true] %s34
      %37 = dma.vmem_to_hbm [thread:$0]  %s33, 128, %s35, [#allocation4]
    $region13: #{tpu_custom_call.1} parent=1 // pred_fallthru
      _
    // Predicated region
    $region14: #{tpu_custom_call.1} parent=1 // pred_check
      _
    $region15: #{tpu_custom_call.1} parent=1 // pred_check_branch
      %39 = sbr.rel (0) target = $region17
    $region16: #{tpu_custom_call.1} parent=1 // pred_region
      %41 = dma.done [#allocation4], 128
    $region17: #{tpu_custom_call.1} parent=1 // pred_fallthru
      _
    %42 = vsyncpa [#allocation3], 1
    %43 = vsyncpa [#allocation4], 1

</llo_original>
